<compile_context>
chip_gen: v5e
topology: v5e:2x2
jax: 0.10.0
libtpu: 0.0.40
codegen_flags: <defaults>
</compile_context>

<pallas_src>
import functools

import jax
import jax.numpy as jnp
from jax.experimental import pallas as pl
from jax.experimental.pallas import tpu as pltpu

HIDDEN = 64                 # per-head hidden width; fused width = 2*HIDDEN = 128 (full MXU tile)
FUSED = 2 * HIDDEN
LANES = 128                 # output-slab width (lane-dense stores)
LOG2PI = float(jnp.log(2.0 * jnp.pi))
MAX_TILE_B = 512            # double-buffered (512,1024) f32 tiles fit easily in v7x's 64 MiB VMEM

_CPARAMS = pltpu.CompilerParams(
    dimension_semantics=("parallel",),
    vmem_limit_bytes=32 * 1024 * 1024,
)


def _round_up(x, m):
    return (x + m - 1) // m * m


def _tile_and_pad(batch):
    tile_b = MAX_TILE_B if batch >= MAX_TILE_B else _round_up(batch, 16)
    return tile_b, _round_up(batch, tile_b)


def _pad_rows(a, n):
    if a.shape[0] == n:
        return a
    return jnp.pad(a, ((0, n - a.shape[0]), (0, 0)))


# ----------------------------- in-kernel helpers -----------------------------

def _fused_head(img, loc, w1i, w1l, b1, w2, b2, w3, b3, adim):
    """Fused actor+critic MLP. Returns (head, lane): head[:, :adim] = tanh actor mean,
    head[:, adim] = linear critic value, every other lane is exactly 0."""
    f32, bf16 = jnp.float32, jnp.bfloat16
    # layer 1: image part on the MXU (bf16 operands, f32 accumulate)
    h1 = jnp.dot(img.astype(bf16), w1i, preferred_element_type=f32) + b1
    # location part unrolled on the VPU (contraction dim is tiny -> no K=2 MXU matmul)
    locf = loc.astype(bf16).astype(f32)
    w1lf = w1l.astype(f32)
    for d in range(loc.shape[-1]):
        h1 = h1 + locf[:, d:d + 1] * w1lf[d:d + 1, :]
    h1 = jnp.tanh(h1).astype(bf16)
    h2 = jnp.tanh(jnp.dot(h1, w2, preferred_element_type=f32) + b2).astype(bf16)
    o = jnp.dot(h2, w3, preferred_element_type=f32) + b3                 # (tile_b, LANES) f32
    lane = jax.lax.broadcasted_iota(jnp.int32, o.shape, 1)
    head = jnp.where(lane < adim, jnp.tanh(o), o)    # tanh only the actor lanes; critic stays linear
    return head, lane


# --------------------------------- kernels -----------------------------------

def _evaluate_kernel(adim, img_ref, loc_ref, act_ref, invvar_ref, lpc_ref,
                     w1i_ref, w1l_ref, b1_ref, w2_ref, b2_ref, w3_ref, b3_ref,
                     out_ref):
    head, lane = _fused_head(img_ref[...], loc_ref[...],
                             w1i_ref[...], w1l_ref[...], b1_ref[...],
                             w2_ref[...], b2_ref[...], w3_ref[...], b3_ref[...], adim)
    # inv_var is zero beyond the action lanes, so the value/zero lanes drop out of the sum.
    diff = act_ref[...] - head
    quad = jnp.sum(diff * diff * invvar_ref[...], axis=-1, keepdims=True)      # (tile_b, 1)
    logp = -0.5 * quad + lpc_ref[...]
    # slab: lanes [0:A]=mean, lane A=value, lane A+1=log-prob -> one unmasked 128-wide store.
    out_ref[...] = head + jnp.where(lane == adim + 1, logp, 0.0)


def _act_kernel(adim, img_ref, loc_ref, noise_ref, invvar_ref, std_ref, lpc_ref,
                w1i_ref, w1l_ref, b1_ref, w2_ref, b2_ref, w3_ref, b3_ref,
                out_ref):
    head, lane = _fused_head(img_ref[...], loc_ref[...],
                             w1i_ref[...], w1l_ref[...], b1_ref[...],
                             w2_ref[...], b2_ref[...], w3_ref[...], b3_ref[...], adim)
    pert = std_ref[...] * noise_ref[...]           # std is zero beyond the actor lanes
    sampled = head + pert                          # lanes [0:A]=action sample, lane A=value
    quad = jnp.sum(pert * pert * invvar_ref[...], axis=-1, keepdims=True)
    logp = -0.5 * quad + lpc_ref[...]
    out_ref[...] = sampled + jnp.where(lane == adim + 1, logp, 0.0)


# ------------------------------ spec helpers ----------------------------------

def _row_spec(tile_b, width):
    return pl.BlockSpec((tile_b, width), lambda i: (i, 0))


def _const_spec(shape):
    return pl.BlockSpec(shape, lambda i: (0, 0))


def _weight_specs(img_feat, loc_dim):
    return [
        _const_spec((img_feat, FUSED)),   # w1_img   (resident across grid steps)
        _const_spec((loc_dim, FUSED)),    # w1_loc
        _const_spec((1, FUSED)),          # b1
        _const_spec((FUSED, FUSED)),      # w2 (block-diagonal actor|critic)
        _const_spec((1, FUSED)),          # b2
        _const_spec((FUSED, LANES)),      # w3 (actor -> lanes [0:A], critic -> lane A)
        _const_spec((1, LANES)),          # b3
    ]


# ------------------------------- jitted paths ----------------------------------

@functools.partial(jax.jit, static_argnames=("action_dim",))
def _evaluate_fwd(img_flat, loc, action, action_var, kparams, *, action_dim):
    batch, img_feat = img_flat.shape
    loc_dim = loc.shape[-1]
    tile_b, b_pad = _tile_and_pad(batch)

    var = action_var.astype(jnp.float32)                                   # (A,)
    inv_var = jnp.zeros((1, LANES), jnp.float32).at[0, :action_dim].set(1.0 / var)
    logdet = jnp.sum(jnp.log(var))
    lpc = (-0.5 * (action_dim * LOG2PI + logdet)).reshape(1, 1)

    img_p = _pad_rows(img_flat, b_pad)
    loc_p = _pad_rows(loc, b_pad)
    act_slab = jnp.zeros((b_pad, LANES), jnp.float32)
    act_slab = act_slab.at[:batch, :action_dim].set(action.astype(jnp.float32))

    out = pl.pallas_call(
        functools.partial(_evaluate_kernel, action_dim),
        grid=(b_pad // tile_b,),
        in_specs=[_row_spec(tile_b, img_feat),
                  _row_spec(tile_b, loc_dim),
                  _row_spec(tile_b, LANES),
                  _const_spec((1, LANES)),
                  _const_spec((1, 1))] + _weight_specs(img_feat, loc_dim),
        out_specs=_row_spec(tile_b, LANES),
        out_shape=jax.ShapeDtypeStruct((b_pad, LANES), jnp.float32),
        compiler_params=_CPARAMS,
    )(img_p, loc_p, act_slab, inv_var, lpc, *kparams)

    logp = out[:batch, action_dim + 1]
    values = out[:batch, action_dim:action_dim + 1]
    # entropy of a diag-cov MVN is batch-constant -> computed in the wrapper, not per tile.
    entropy = jnp.full((batch,), 0.5 * action_dim * (1.0 + LOG2PI)) + 0.5 * logdet
    return logp, values, entropy


@functools.partial(jax.jit, static_argnames=("action_dim",))
def _act_fwd(img_flat, loc, rng_key, action_var, kparams, *, action_dim):
    batch, img_feat = img_flat.shape
    loc_dim = loc.shape[-1]
    tile_b, b_pad = _tile_and_pad(batch)

    var = action_var.astype(jnp.float32)
    inv_var = jnp.zeros((1, LANES), jnp.float32).at[0, :action_dim].set(1.0 / var)
    std = jnp.zeros((1, LANES), jnp.float32).at[0, :action_dim].set(jnp.sqrt(var))
    lpc = (-0.5 * (action_dim * LOG2PI + jnp.sum(jnp.log(var)))).reshape(1, 1)

    noise = jax.random.normal(rng_key, (b_pad, LANES), jnp.float32)
    img_p = _pad_rows(img_flat, b_pad)
    loc_p = _pad_rows(loc, b_pad)

    out = pl.pallas_call(
        functools.partial(_act_kernel, action_dim),
        grid=(b_pad // tile_b,),
        in_specs=[_row_spec(tile_b, img_feat),
                  _row_spec(tile_b, loc_dim),
                  _row_spec(tile_b, LANES),
                  _const_spec((1, LANES)),
                  _const_spec((1, LANES)),
                  _const_spec((1, 1))] + _weight_specs(img_feat, loc_dim),
        out_specs=_row_spec(tile_b, LANES),
        out_shape=jax.ShapeDtypeStruct((b_pad, LANES), jnp.float32),
        compiler_params=_CPARAMS,
    )(img_p, loc_p, noise, inv_var, std, lpc, *kparams)

    action = out[:batch, :action_dim]
    logp = out[:batch, action_dim + 1]
    value = out[:batch, action_dim:action_dim + 1]
    return action, logp, value


# --------------------------------- parameters ----------------------------------

def _init_params(key, in_dim, action_dim):
    ks = jax.random.split(key, 6)

    def lin(k, fan_in, fan_out):
        w = jax.random.normal(k, (fan_in, fan_out), jnp.float32) * (1.0 / jnp.sqrt(fan_in))
        b = jnp.zeros((1, fan_out), jnp.float32)
        return w, b

    aw1, ab1 = lin(ks[0], in_dim, HIDDEN)
    aw2, ab2 = lin(ks[1], HIDDEN, HIDDEN)
    aw3, ab3 = lin(ks[2], HIDDEN, action_dim)
    cw1, cb1 = lin(ks[3], in_dim, HIDDEN)
    cw2, cb2 = lin(ks[4], HIDDEN, HIDDEN)
    cw3, cb3 = lin(ks[5], HIDDEN, 1)
    return (aw1, ab1, aw2, ab2, aw3, ab3, cw1, cb1, cw2, cb2, cw3, cb3)


def _pack_params(params, img_feat, action_dim):
    """Fuse per-head params into the 128-wide kernel layout; weights stored bf16, biases f32."""
    (aw1, ab1, aw2, ab2, aw3, ab3, cw1, cb1, cw2, cb2, cw3, cb3) = params
    w1 = jnp.concatenate([aw1, cw1], axis=1)                       # (F, 128)
    w1_img, w1_loc = w1[:img_feat], w1[img_feat:]
    b1 = jnp.concatenate([ab1, cb1], axis=1)
    w2 = jnp.zeros((FUSED, FUSED), jnp.float32)
    w2 = w2.at[:HIDDEN, :HIDDEN].set(aw2).at[HIDDEN:, HIDDEN:].set(cw2)
    b2 = jnp.concatenate([ab2, cb2], axis=1)
    w3 = jnp.zeros((FUSED, LANES), jnp.float32)
    w3 = w3.at[:HIDDEN, :action_dim].set(aw3)
    w3 = w3.at[HIDDEN:, action_dim:action_dim + 1].set(cw3)
    b3 = jnp.zeros((1, LANES), jnp.float32)
    b3 = b3.at[:, :action_dim].set(ab3).at[:, action_dim:action_dim + 1].set(cb3)
    bf16 = jnp.bfloat16
    return (w1_img.astype(bf16), w1_loc.astype(bf16), b1,
            w2.astype(bf16), b2, w3.astype(bf16), b3)


class ActorCriticPallas:
    def __init__(self, action_dim, action_std_init, img_feat, loc_dim, key):
        assert action_dim + 2 <= LANES
        self.action_dim = action_dim
        self.action_var = jnp.full((action_dim,), action_std_init * action_std_init, jnp.float32)
        self.ref_params = _init_params(key, img_feat + loc_dim, action_dim)
        self.kparams = _pack_params(self.ref_params, img_feat, action_dim)

    def set_action_std(self, new_action_std):
        self.action_var = jnp.full((self.action_dim,), new_action_std * new_action_std, jnp.float32)

    def evaluate(self, image, location, action):
        if self.action_dim == 1:
            action = action.reshape(-1, self.action_dim)
        img_flat = image.reshape(image.shape[0], -1)
        return _evaluate_fwd(img_flat, location, action, self.action_var, self.kparams,
                             action_dim=self.action_dim)

    def act(self, image, location, rng_key):
        img_flat = image.reshape(image.shape[0], -1)
        return _act_fwd(img_flat, location, rng_key, self.action_var, self.kparams,
                        action_dim=self.action_dim)


# --------------------------------- reference ----------------------------------

def _bf(a):
    return a.astype(jnp.bfloat16).astype(jnp.float32)


def _forward_ref(img_flat, loc, params):
    """Pure-JAX reference with the same bf16-operand / f32-accumulate numerics as the kernel."""
    (aw1, ab1, aw2, ab2, aw3, ab3, cw1, cb1, cw2, cb2, cw3, cb3) = params
    x = _bf(jnp.concatenate([img_flat, loc], axis=-1))

    def head(w1, b1, w2, b2, w3, b3, tanh_out):
        h = _bf(jnp.tanh(x @ _bf(w1) + b1))
        h = _bf(jnp.tanh(h @ _bf(w2) + b2))
        o = h @ _bf(w3) + b3
        return jnp.tanh(o) if tanh_out else o

    mean = head(aw1, ab1, aw2, ab2, aw3, ab3, True)
    val = head(cw1, cb1, cw2, cb2, cw3, cb3, False)
    return mean, val


# ----------------------------------- main -------------------------------------

if __name__ == "__main__":
    key = jax.random.PRNGKey(0)
    k_img, k_loc, k_act, k_par, k_smp = jax.random.split(key, 5)

    B, C, H, W = 2, 4, 16, 16
    LOC_DIM, ACTION_DIM = 2, 3
    ACTION_STD_INIT = 0.6

    image = jax.random.normal(k_img, (B, C, H, W), jnp.float32)        # NCHW, like PyTorch
    location = jax.random.normal(k_loc, (B, LOC_DIM), jnp.float32)
    action = jax.random.normal(k_act, (B, ACTION_DIM), jnp.float32)

    model = ActorCriticPallas(ACTION_DIM, ACTION_STD_INIT,
                              img_feat=C * H * W, loc_dim=LOC_DIM, key=k_par)

    # evaluate path
    logp, values, entropy = model.evaluate(image, location, action)
    jax.block_until_ready((logp, values, entropy))

    # act path (sampling noise generated in the jitted wrapper from the key)
    act_sample, act_logp, act_val = model.act(image, location, k_smp)
    jax.block_until_ready((act_sample, act_logp, act_val))

    # --- checks against the pure-JAX reference --------------------------------
    img_flat = image.reshape(B, -1)
    mean_ref, val_ref = _forward_ref(img_flat, location, model.ref_params)
    var = model.action_var
    logdet = jnp.sum(jnp.log(var))
    diff = action - mean_ref
    logp_ref = -0.5 * (jnp.sum(diff * diff / var, -1) + ACTION_DIM * LOG2PI + logdet)
    ent_ref = jnp.full((B,), 0.5 * ACTION_DIM * (1.0 + LOG2PI)) + 0.5 * logdet

    assert logp.shape == (B,) and values.shape == (B, 1) and entropy.shape == (B,)
    assert jnp.allclose(logp, logp_ref, rtol=2e-3, atol=2e-3)
    assert jnp.allclose(values, val_ref, rtol=2e-3, atol=2e-3)
    assert jnp.allclose(entropy, ent_ref, rtol=1e-5, atol=1e-5)

    # act path: reconstruct with the exact same noise the wrapper generated
    _, b_pad = _tile_and_pad(B)
    noise = jax.random.normal(k_smp, (b_pad, LANES), jnp.float32)[:B, :ACTION_DIM]
    std = jnp.sqrt(var)
    exp_action = mean_ref + std * noise
    exp_logp = -0.5 * (jnp.sum((std * noise) ** 2 / var, -1) + ACTION_DIM * LOG2PI + logdet)
    assert act_sample.shape == (B, ACTION_DIM) and act_val.shape == (B, 1)
    assert jnp.allclose(act_sample, exp_action, rtol=2e-3, atol=2e-3)
    assert jnp.allclose(act_logp, exp_logp, rtol=2e-3, atol=2e-3)
    assert jnp.allclose(act_val, val_ref, rtol=2e-3, atol=2e-3)
    assert bool(jnp.all(jnp.isfinite(act_logp)))

    print("KERNEL_OK")
</pallas_src>

<mosaic_0001>
module attributes {stable_mosaic.version = 11 : i64} {
  func.func @_evaluate_kernel(%arg0: i32, %arg1: memref<16x1024xf32, #tpu.memory_space<vmem>>, %arg2: memref<16x2xf32, #tpu.memory_space<vmem>>, %arg3: memref<16x128xf32, #tpu.memory_space<vmem>>, %arg4: memref<1x128xf32, #tpu.memory_space<vmem>>, %arg5: memref<1x1xf32, #tpu.memory_space<vmem>>, %arg6: memref<1024x128xbf16, #tpu.memory_space<vmem>>, %arg7: memref<2x128xbf16, #tpu.memory_space<vmem>>, %arg8: memref<1x128xf32, #tpu.memory_space<vmem>>, %arg9: memref<128x128xbf16, #tpu.memory_space<vmem>>, %arg10: memref<1x128xf32, #tpu.memory_space<vmem>>, %arg11: memref<128x128xbf16, #tpu.memory_space<vmem>>, %arg12: memref<1x128xf32, #tpu.memory_space<vmem>>, %arg13: memref<16x128xf32, #tpu.memory_space<vmem>>) attributes {dimension_semantics = [#tpu.dimension_semantics<parallel>], iteration_bounds = array<i64: 1>, scalar_prefetch = 0 : i64, scratch_operands = 0 : i64, tpu.core_type = #tpu.core_type<tc>, window_params = [{transform_indices = @transform_0, window_bounds = array<i64: 16, 1024>}, {transform_indices = @transform_1, window_bounds = array<i64: 16, 2>}, {transform_indices = @transform_2, window_bounds = array<i64: 16, 128>}, {pipeline_mode = #tpu.pipeline_mode<synchronous>, transform_indices = @transform_3, window_bounds = array<i64: 1, 128>}, {pipeline_mode = #tpu.pipeline_mode<synchronous>, transform_indices = @transform_4, window_bounds = array<i64: 1, 1>}, {pipeline_mode = #tpu.pipeline_mode<synchronous>, transform_indices = @transform_5, window_bounds = array<i64: 1024, 128>}, {pipeline_mode = #tpu.pipeline_mode<synchronous>, transform_indices = @transform_6, window_bounds = array<i64: 2, 128>}, {pipeline_mode = #tpu.pipeline_mode<synchronous>, transform_indices = @transform_7, window_bounds = array<i64: 1, 128>}, {pipeline_mode = #tpu.pipeline_mode<synchronous>, transform_indices = @transform_8, window_bounds = array<i64: 128, 128>}, {pipeline_mode = #tpu.pipeline_mode<synchronous>, transform_indices = @transform_9, window_bounds = array<i64: 1, 128>}, {pipeline_mode = #tpu.pipeline_mode<synchronous>, transform_indices = @transform_10, window_bounds = array<i64: 128, 128>}, {pipeline_mode = #tpu.pipeline_mode<synchronous>, transform_indices = @transform_11, window_bounds = array<i64: 1, 128>}, {transform_indices = @transform_12, window_bounds = array<i64: 16, 128>}]} {
    %c0 = arith.constant 0 : index
    %c0_0 = arith.constant 0 : index
    %0 = vector.load %arg1[%c0, %c0_0] : memref<16x1024xf32, #tpu.memory_space<vmem>>, vector<16x1024xf32>
    %c0_1 = arith.constant 0 : index
    %c0_2 = arith.constant 0 : index
    %1 = vector.load %arg2[%c0_1, %c0_2] : memref<16x2xf32, #tpu.memory_space<vmem>>, vector<16x2xf32>
    %c0_3 = arith.constant 0 : index
    %c0_4 = arith.constant 0 : index
    %2 = vector.load %arg6[%c0_3, %c0_4] : memref<1024x128xbf16, #tpu.memory_space<vmem>>, vector<1024x128xbf16>
    %c0_5 = arith.constant 0 : index
    %c0_6 = arith.constant 0 : index
    %3 = vector.load %arg7[%c0_5, %c0_6] : memref<2x128xbf16, #tpu.memory_space<vmem>>, vector<2x128xbf16>
    %c0_7 = arith.constant 0 : index
    %c0_8 = arith.constant 0 : index
    %4 = vector.load %arg8[%c0_7, %c0_8] : memref<1x128xf32, #tpu.memory_space<vmem>>, vector<1x128xf32>
    %c0_9 = arith.constant 0 : index
    %c0_10 = arith.constant 0 : index
    %5 = vector.load %arg9[%c0_9, %c0_10] : memref<128x128xbf16, #tpu.memory_space<vmem>>, vector<128x128xbf16>
    %c0_11 = arith.constant 0 : index
    %c0_12 = arith.constant 0 : index
    %6 = vector.load %arg10[%c0_11, %c0_12] : memref<1x128xf32, #tpu.memory_space<vmem>>, vector<1x128xf32>
    %c0_13 = arith.constant 0 : index
    %c0_14 = arith.constant 0 : index
    %7 = vector.load %arg11[%c0_13, %c0_14] : memref<128x128xbf16, #tpu.memory_space<vmem>>, vector<128x128xbf16>
    %c0_15 = arith.constant 0 : index
    %c0_16 = arith.constant 0 : index
    %8 = vector.load %arg12[%c0_15, %c0_16] : memref<1x128xf32, #tpu.memory_space<vmem>>, vector<1x128xf32>
    %9 = arith.truncf %0 : vector<16x1024xf32> to vector<16x1024xbf16>
    %cst = arith.constant dense<0.000000e+00> : vector<16x128xf32>
    %10 = tpu.matmul %9, %2, %cst {dimension_numbers = #tpu.dot_dimension_numbers<[1], [0], [0], [1], [0, 0, 1, 1], [], []>} : vector<16x1024xbf16>, vector<1024x128xbf16>, vector<16x128xf32> -> vector<16x128xf32>
    %11 = vector.broadcast %4 : vector<1x128xf32> to vector<16x128xf32>
    %12 = arith.addf %10, %11 : vector<16x128xf32>
    %13 = arith.truncf %1 : vector<16x2xf32> to vector<16x2xbf16>
    %14 = arith.extf %13 : vector<16x2xbf16> to vector<16x2xf32>
    %15 = arith.extf %3 : vector<2x128xbf16> to vector<2x128xf32>
    %16 = vector.extract_strided_slice %14 {offsets = [0, 0], sizes = [16, 1], strides = [1, 1]} : vector<16x2xf32> to vector<16x1xf32>
    %17 = vector.extract_strided_slice %15 {offsets = [0, 0], sizes = [1, 128], strides = [1, 1]} : vector<2x128xf32> to vector<1x128xf32>
    %18 = vector.broadcast %16 : vector<16x1xf32> to vector<16x128xf32>
    %19 = vector.broadcast %17 : vector<1x128xf32> to vector<16x128xf32>
    %20 = arith.mulf %18, %19 : vector<16x128xf32>
    %21 = arith.addf %12, %20 : vector<16x128xf32>
    %22 = vector.extract_strided_slice %14 {offsets = [0, 1], sizes = [16, 1], strides = [1, 1]} : vector<16x2xf32> to vector<16x1xf32>
    %23 = vector.extract_strided_slice %15 {offsets = [1, 0], sizes = [1, 128], strides = [1, 1]} : vector<2x128xf32> to vector<1x128xf32>
    %24 = vector.broadcast %22 : vector<16x1xf32> to vector<16x128xf32>
    %25 = vector.broadcast %23 : vector<1x128xf32> to vector<16x128xf32>
    %26 = arith.mulf %24, %25 : vector<16x128xf32>
    %27 = arith.addf %21, %26 : vector<16x128xf32>
    %28 = math.tanh %27 : vector<16x128xf32>
    %29 = arith.truncf %28 : vector<16x128xf32> to vector<16x128xbf16>
    %cst_17 = arith.constant dense<0.000000e+00> : vector<16x128xf32>
    %30 = tpu.matmul %29, %5, %cst_17 {dimension_numbers = #tpu.dot_dimension_numbers<[1], [0], [0], [1], [0, 0, 1, 1], [], []>} : vector<16x128xbf16>, vector<128x128xbf16>, vector<16x128xf32> -> vector<16x128xf32>
    %31 = vector.broadcast %6 : vector<1x128xf32> to vector<16x128xf32>
    %32 = arith.addf %30, %31 : vector<16x128xf32>
    %33 = math.tanh %32 : vector<16x128xf32>
    %34 = arith.truncf %33 : vector<16x128xf32> to vector<16x128xbf16>
    %cst_18 = arith.constant dense<0.000000e+00> : vector<16x128xf32>
    %35 = tpu.matmul %34, %7, %cst_18 {dimension_numbers = #tpu.dot_dimension_numbers<[1], [0], [0], [1], [0, 0, 1, 1], [], []>} : vector<16x128xbf16>, vector<128x128xbf16>, vector<16x128xf32> -> vector<16x128xf32>
    %36 = vector.broadcast %8 : vector<1x128xf32> to vector<16x128xf32>
    %37 = arith.addf %35, %36 : vector<16x128xf32>
    %38 = tpu.iota {dimensions = array<i32: 1>} : vector<16x128xi32>
    %c3_i32 = arith.constant 3 : i32
    %39 = vector.broadcast %c3_i32 : i32 to vector<16x128xi32>
    %40 = arith.cmpi slt, %38, %39 : vector<16x128xi32>
    %41 = math.tanh %37 : vector<16x128xf32>
    %42 = arith.select %40, %41, %37 : vector<16x128xi1>, vector<16x128xf32>
    %c0_19 = arith.constant 0 : index
    %c0_20 = arith.constant 0 : index
    %43 = vector.load %arg3[%c0_19, %c0_20] : memref<16x128xf32, #tpu.memory_space<vmem>>, vector<16x128xf32>
    %44 = arith.subf %43, %42 : vector<16x128xf32>
    %45 = arith.mulf %44, %44 : vector<16x128xf32>
    %c0_21 = arith.constant 0 : index
    %c0_22 = arith.constant 0 : index
    %46 = vector.load %arg4[%c0_21, %c0_22] : memref<1x128xf32, #tpu.memory_space<vmem>>, vector<1x128xf32>
    %47 = vector.broadcast %46 : vector<1x128xf32> to vector<16x128xf32>
    %48 = arith.mulf %45, %47 : vector<16x128xf32>
    %cst_23 = arith.constant dense<0.000000e+00> : vector<16xf32>
    %49 = vector.multi_reduction <add>, %48, %cst_23 [1] : vector<16x128xf32> to vector<16xf32>
    %50 = vector.shape_cast %49 : vector<16xf32> to vector<16x1xf32>
    %cst_24 = arith.constant -5.000000e-01 : f32
    %51 = vector.broadcast %cst_24 : f32 to vector<16x1xf32>
    %52 = arith.mulf %51, %50 : vector<16x1xf32>
    %c0_25 = arith.constant 0 : index
    %c0_26 = arith.constant 0 : index
    %53 = vector.load %arg5[%c0_25, %c0_26] : memref<1x1xf32, #tpu.memory_space<vmem>>, vector<1x1xf32>
    %54 = vector.broadcast %53 : vector<1x1xf32> to vector<16x1xf32>
    %55 = arith.addf %52, %54 : vector<16x1xf32>
    %c4_i32 = arith.constant 4 : i32
    %56 = vector.broadcast %c4_i32 : i32 to vector<16x128xi32>
    %57 = arith.cmpi eq, %38, %56 : vector<16x128xi32>
    %cst_27 = arith.constant 0.000000e+00 : f32
    %58 = vector.shape_cast %55 : vector<16x1xf32> to vector<16x1xf32>
    %59 = vector.broadcast %58 : vector<16x1xf32> to vector<16x128xf32>
    %60 = vector.broadcast %cst_27 : f32 to vector<16x128xf32>
    %61 = arith.select %57, %59, %60 : vector<16x128xi1>, vector<16x128xf32>
    %62 = arith.addf %42, %61 : vector<16x128xf32>
    %c0_28 = arith.constant 0 : index
    %c0_29 = arith.constant 0 : index
    %63 = vector.load %arg13[%c0_28, %c0_29] : memref<16x128xf32, #tpu.memory_space<vmem>>, vector<16x128xf32>
    tpu.vector_store %arg13[%c0_28, %c0_29], %62 {strides = array<i32>} : memref<16x128xf32, #tpu.memory_space<vmem>>, vector<16x128xf32>,
    return
  }
  func.func @transform_0(%arg0: i32) -> (i32, i32) {
    %c0_i32 = arith.constant 0 : i32
    %c0_i32_0 = arith.constant 0 : i32
    return %arg0, %c0_i32 : i32, i32
  }
  func.func @transform_1(%arg0: i32) -> (i32, i32) {
    %c0_i32 = arith.constant 0 : i32
    %c0_i32_0 = arith.constant 0 : i32
    return %arg0, %c0_i32 : i32, i32
  }
  func.func @transform_2(%arg0: i32) -> (i32, i32) {
    %c0_i32 = arith.constant 0 : i32
    %c0_i32_0 = arith.constant 0 : i32
    return %arg0, %c0_i32 : i32, i32
  }
  func.func @transform_3(%arg0: i32) -> (i32, i32) {
    %c0_i32 = arith.constant 0 : i32
    %c0_i32_0 = arith.constant 0 : i32
    %c0_i32_1 = arith.constant 0 : i32
    return %c0_i32, %c0_i32_0 : i32, i32
  }
  func.func @transform_4(%arg0: i32) -> (i32, i32) {
    %c0_i32 = arith.constant 0 : i32
    %c0_i32_0 = arith.constant 0 : i32
    %c0_i32_1 = arith.constant 0 : i32
    return %c0_i32, %c0_i32_0 : i32, i32
  }
  func.func @transform_5(%arg0: i32) -> (i32, i32) {
    %c0_i32 = arith.constant 0 : i32
    %c0_i32_0 = arith.constant 0 : i32
    %c0_i32_1 = arith.constant 0 : i32
    return %c0_i32, %c0_i32_0 : i32, i32
  }
  func.func @transform_6(%arg0: i32) -> (i32, i32) {
    %c0_i32 = arith.constant 0 : i32
    %c0_i32_0 = arith.constant 0 : i32
    %c0_i32_1 = arith.constant 0 : i32
    return %c0_i32, %c0_i32_0 : i32, i32
  }
  func.func @transform_7(%arg0: i32) -> (i32, i32) {
    %c0_i32 = arith.constant 0 : i32
    %c0_i32_0 = arith.constant 0 : i32
    %c0_i32_1 = arith.constant 0 : i32
    return %c0_i32, %c0_i32_0 : i32, i32
  }
  func.func @transform_8(%arg0: i32) -> (i32, i32) {
    %c0_i32 = arith.constant 0 : i32
    %c0_i32_0 = arith.constant 0 : i32
    %c0_i32_1 = arith.constant 0 : i32
    return %c0_i32, %c0_i32_0 : i32, i32
  }
  func.func @transform_9(%arg0: i32) -> (i32, i32) {
    %c0_i32 = arith.constant 0 : i32
    %c0_i32_0 = arith.constant 0 : i32
    %c0_i32_1 = arith.constant 0 : i32
    return %c0_i32, %c0_i32_0 : i32, i32
  }
  func.func @transform_10(%arg0: i32) -> (i32, i32) {
    %c0_i32 = arith.constant 0 : i32
    %c0_i32_0 = arith.constant 0 : i32
    %c0_i32_1 = arith.constant 0 : i32
    return %c0_i32, %c0_i32_0 : i32, i32
  }
  func.func @transform_11(%arg0: i32) -> (i32, i32) {
    %c0_i32 = arith.constant 0 : i32
    %c0_i32_0 = arith.constant 0 : i32
    %c0_i32_1 = arith.constant 0 : i32
    return %c0_i32, %c0_i32_0 : i32, i32
  }
  func.func @transform_12(%arg0: i32) -> (i32, i32) {
    %c0_i32 = arith.constant 0 : i32
    %c0_i32_0 = arith.constant 0 : i32
    return %arg0, %c0_i32 : i32, i32
  }
}

</mosaic_0001>

<llo_original>
// kernel: _evaluate_fwd.1
$region0: #{_evaluate_fwd.1}
  #allocation0 [shape = 'u32[]', space=smem, size = 0x4, offset = 0x4, fixed_abs, tag = 'smem constant byte address 0x4 - core index']
  #allocation1 [shape = 'u32[72,128]{1,0:T(1,128)}', space=vmem, size = 0x9000, scoped, tag = 'internal scratch']
  #allocation2 [shape = 'f32[1,1]{1,0:T(1,128)S(1)}', space=vmem, size = 0x200, scoped, tag = 'scoped memory for _evaluate_fwd.1']
  %s0 = inlined_call_operand.vmem [shape: f32[16,1024], index: 0, kind: input, shape index: {}]
  %s1 = inlined_call_operand.vmem [shape: f32[16,2], index: 1, kind: input, shape index: {}]
  %s2 = inlined_call_operand.vmem [shape: f32[16,128], index: 2, kind: input, shape index: {}]
  %s3 = inlined_call_operand.vmem [shape: f32[1,128], index: 3, kind: input, shape index: {}]
  %s4 = inlined_call_operand.<no memory space> [shape: f32[1,1], index: 4, kind: input, shape index: {}]
  %s5 = inlined_call_operand.hbm [shape: bf16[1024,128], index: 5, kind: input, shape index: {}]
  %s6 = inlined_call_operand.vmem [shape: bf16[2,128], index: 6, kind: input, shape index: {}]
  %s7 = inlined_call_operand.vmem [shape: f32[1,128], index: 7, kind: input, shape index: {}]
  %s8 = inlined_call_operand.vmem [shape: bf16[128,128], index: 8, kind: input, shape index: {}]
  %s9 = inlined_call_operand.vmem [shape: f32[1,128], index: 9, kind: input, shape index: {}]
  %s10 = inlined_call_operand.vmem [shape: bf16[128,128], index: 10, kind: input, shape index: {}]
  %s11 = inlined_call_operand.vmem [shape: f32[1,128], index: 11, kind: input, shape index: {}]
  %s12 = inlined_call_operand.vmem [shape: f32[16,128], index: 12, kind: output, shape index: {}]
  %s13 = sld [smem:[#allocation0]]
  $region62: #{_evaluate_fwd.1} parent=0
    _
  %s15 = ssub.s32 1, %s13
  %s16 = scalar_select 0, %s15, %s13
  %v17 = vstv %s4
  %18 = vst [vmem:[#allocation2] sm:$0x1] %v17
  $region1: #{_evaluate_fwd.1} parent=0
    #allocation3 [shape = 'u8[262144]{0}', space=vmem, size = 0x40000, scoped, tag = 'input window, operand 5, single buffered']
    #allocation4 [shape = 's32[1]{0}', space=sflag, size = 0x4, scoped, tag = 'scoped memory for _evaluate_fwd.1']
    %19 = vsyncpa [#allocation4], 0
    // Predicated region
    $region2: #{_evaluate_fwd.1} parent=1 // pred_check
      _
    $region3: #{_evaluate_fwd.1} parent=1 // pred_check_branch
      %21 = sbr.rel (0) target = $region5
    $region4: #{_evaluate_fwd.1} parent=1 // pred_region
      _
    $region5: #{_evaluate_fwd.1} parent=1 // pred_fallthru
      _
    // Predicated region
    $region6: #{_evaluate_fwd.1} parent=1 // pred_check
      _
    $region7: #{_evaluate_fwd.1} parent=1 // pred_check_branch
      %23 = sbr.rel (0) target = $region9
    $region8: #{_evaluate_fwd.1} parent=1 // pred_region
      _
    $region9: #{_evaluate_fwd.1} parent=1 // pred_fallthru
      _
    // Predicated region
    $region10: #{_evaluate_fwd.1} parent=1 // pred_check
      _
    $region11: #{_evaluate_fwd.1} parent=1 // pred_check_branch
      %25 = sbr.rel (0) target = $region13
    $region12: #{_evaluate_fwd.1} parent=1 // pred_region
      _
    $region13: #{_evaluate_fwd.1} parent=1 // pred_fallthru
      _
    // Predicated region
    $region14: #{_evaluate_fwd.1} parent=1 // pred_check
      _
    $region15: #{_evaluate_fwd.1} parent=1 // pred_check_branch
      %27 = sbr.rel (0) target = $region17
    $region16: #{_evaluate_fwd.1} parent=1 // pred_region
      _
    $region17: #{_evaluate_fwd.1} parent=1 // pred_fallthru
      _
    // Predicated region
    $region18: #{_evaluate_fwd.1} parent=1 // pred_check
      _
    $region19: #{_evaluate_fwd.1} parent=1 // pred_check_branch
      %29 = sbr.rel (0) target = $region21
    $region20: #{_evaluate_fwd.1} parent=1 // pred_region
      _
    $region21: #{_evaluate_fwd.1} parent=1 // pred_fallthru
      _
    // Predicated region
    $region22: #{_evaluate_fwd.1} parent=1 // pred_check
      _
    $region23: #{_evaluate_fwd.1} parent=1 // pred_check_branch
      %31 = sbr.rel (0) target = $region25
    $region24: #{_evaluate_fwd.1} parent=1 // pred_region
      %33 = vsyncadd [#allocation4], 0
      %s34 = sshll.u32 %s5, 4
      %s35 = int_to_ptr.hbm [resolvable:$true] %s34
      %s36 = sshll.u32 [#allocation3], 4
      %s37 = int_to_ptr.vmem [resolvable:$true] %s36
      %42 = dma.hbm_to_vmem [thread:$0]  %s35, 8192, %s37, [#allocation4], 64, 64, 4
    $region25: #{_evaluate_fwd.1} parent=1 // pred_fallthru
      _
    // Predicated region
    $region26: #{_evaluate_fwd.1} parent=1 // pred_check
      _
    $region27: #{_evaluate_fwd.1} parent=1 // pred_check_branch
      %44 = sbr.rel (0) target = $region29
    $region28: #{_evaluate_fwd.1} parent=1 // pred_region
      _
    $region29: #{_evaluate_fwd.1} parent=1 // pred_fallthru
      _
    // Predicated region
    $region30: #{_evaluate_fwd.1} parent=1 // pred_check
      _
    $region31: #{_evaluate_fwd.1} parent=1 // pred_check_branch
      %46 = sbr.rel (0) target = $region33
    $region32: #{_evaluate_fwd.1} parent=1 // pred_region
      _
    $region33: #{_evaluate_fwd.1} parent=1 // pred_fallthru
      _
    // Predicated region
    $region34: #{_evaluate_fwd.1} parent=1 // pred_check
      _
    $region35: #{_evaluate_fwd.1} parent=1 // pred_check_branch
      %48 = sbr.rel (0) target = $region37
    $region36: #{_evaluate_fwd.1} parent=1 // pred_region
      _
    $region37: #{_evaluate_fwd.1} parent=1 // pred_fallthru
      _
    // Predicated region
    $region38: #{_evaluate_fwd.1} parent=1 // pred_check
      _
    $region39: #{_evaluate_fwd.1} parent=1 // pred_check_branch
      %50 = sbr.rel (0) target = $region41
    $region40: #{_evaluate_fwd.1} parent=1 // pred_region
      _
    $region41: #{_evaluate_fwd.1} parent=1 // pred_fallthru
      _
    // Predicated region
    $region42: #{_evaluate_fwd.1} parent=1 // pred_check
      _
    $region43: #{_evaluate_fwd.1} parent=1 // pred_check_branch
      %52 = sbr.rel (0) target = $region45
    $region44: #{_evaluate_fwd.1} parent=1 // pred_region
      _
    $region45: #{_evaluate_fwd.1} parent=1 // pred_fallthru
      _
    // Predicated region
    $region46: #{_evaluate_fwd.1} parent=1 // pred_check
      _
    $region47: #{_evaluate_fwd.1} parent=1 // pred_check_branch
      %54 = sbr.rel (0) target = $region49
    $region48: #{_evaluate_fwd.1} parent=1 // pred_region
      _
    $region49: #{_evaluate_fwd.1} parent=1 // pred_fallthru
      _
    // Predicated region
    $region50: #{_evaluate_fwd.1} parent=1 // pred_check
      _
    $region51: #{_evaluate_fwd.1} parent=1 // pred_check_branch
      %56 = sbr.rel (0) target = $region53
    $region52: #{_evaluate_fwd.1} parent=1 // pred_region
      %58 = dma.done [#allocation4], 8192
    $region53: #{_evaluate_fwd.1} parent=1 // pred_fallthru
      _
    %v59 = vld [vmem:[%s0] sm:$0xff]
    %v60 = vld [vmem:[%s0 + $0x8] sm:$0xff]
    %v61 = vld [vmem:[%s0 + $0x10] sm:$0xff]
    %v62 = vld [vmem:[%s0 + $0x18] sm:$0xff]
    %v63 = vld [vmem:[%s0 + $0x20] sm:$0xff]
    %v64 = vld [vmem:[%s0 + $0x28] sm:$0xff]
    %v65 = vld [vmem:[%s0 + $0x30] sm:$0xff]
    %v66 = vld [vmem:[%s0 + $0x38] sm:$0xff]
    %v67 = vld [vmem:[%s0 + $0x40] sm:$0xff]
    %v68 = vld [vmem:[%s0 + $0x48] sm:$0xff]
    %v69 = vld [vmem:[%s0 + $0x50] sm:$0xff]
    %v70 = vld [vmem:[%s0 + $0x58] sm:$0xff]
    %v71 = vld [vmem:[%s0 + $0x60] sm:$0xff]
    %v72 = vld [vmem:[%s0 + $0x68] sm:$0xff]
    %v73 = vld [vmem:[%s0 + $0x70] sm:$0xff]
    %v74 = vld [vmem:[%s0 + $0x78] sm:$0xff]
    %v75 = vld [vmem:[%s1] sm:$0xff]
    %v76 = vld [vmem:[%s1 + $0x8] sm:$0xff]
    %v77 = vld [vmem:[#allocation3] sm:$0xf]
    %v78 = vld [vmem:[#allocation3 + $0x4] sm:$0xf]
    %v79 = vld [vmem:[#allocation3 + $0x8] sm:$0xf]
    %v80 = vld [vmem:[#allocation3 + $0xc] sm:$0xf]
    %v81 = vld [vmem:[#allocation3 + $0x10] sm:$0xf]
    %v82 = vld [vmem:[#allocation3 + $0x14] sm:$0xf]
    %v83 = vld [vmem:[#allocation3 + $0x18] sm:$0xf]
    %v84 = vld [vmem:[#allocation3 + $0x1c] sm:$0xf]
    %v85 = vld [vmem:[#allocation3 + $0x20] sm:$0xf]
    %v86 = vld [vmem:[#allocation3 + $0x24] sm:$0xf]
    %v87 = vld [vmem:[#allocation3 + $0x28] sm:$0xf]
    %v88 = vld [vmem:[#allocation3 + $0x2c] sm:$0xf]
    %v89 = vld [vmem:[#allocation3 + $0x30] sm:$0xf]
    %v90 = vld [vmem:[#allocation3 + $0x34] sm:$0xf]
    %v91 = vld [vmem:[#allocation3 + $0x38] sm:$0xf]
    %v92 = vld [vmem:[#allocation3 + $0x3c] sm:$0xf]
    %v93 = vld [vmem:[#allocation3 + $0x40] sm:$0xf]
    %v94 = vld [vmem:[#allocation3 + $0x44] sm:$0xf]
    %v95 = vld [vmem:[#allocation3 + $0x48] sm:$0xf]
    %v96 = vld [vmem:[#allocation3 + $0x4c] sm:$0xf]
    %v97 = vld [vmem:[#allocation3 + $0x50] sm:$0xf]
    %v98 = vld [vmem:[#allocation3 + $0x54] sm:$0xf]
    %v99 = vld [vmem:[#allocation3 + $0x58] sm:$0xf]
    %v100 = vld [vmem:[#allocation3 + $0x5c] sm:$0xf]
    %v101 = vld [vmem:[#allocation3 + $0x60] sm:$0xf]
    %v102 = vld [vmem:[#allocation3 + $0x64] sm:$0xf]
    %v103 = vld [vmem:[#allocation3 + $0x68] sm:$0xf]
    %v104 = vld [vmem:[#allocation3 + $0x6c] sm:$0xf]
    %v105 = vld [vmem:[#allocation3 + $0x70] sm:$0xf]
    %v106 = vld [vmem:[#allocation3 + $0x74] sm:$0xf]
    %v107 = vld [vmem:[#allocation3 + $0x78] sm:$0xf]
    %v108 = vld [vmem:[#allocation3 + $0x7c] sm:$0xf]
    %v109 = vld [vmem:[#allocation3 + $0x80] sm:$0xf]
    %v110 = vld [vmem:[#allocation3 + $0x84] sm:$0xf]
    %v111 = vld [vmem:[#allocation3 + $0x88] sm:$0xf]
    %v112 = vld [vmem:[#allocation3 + $0x8c] sm:$0xf]
    %v113 = vld [vmem:[#allocation3 + $0x90] sm:$0xf]
    %v114 = vld [vmem:[#allocation3 + $0x94] sm:$0xf]
    %v115 = vld [vmem:[#allocation3 + $0x98] sm:$0xf]
    %v116 = vld [vmem:[#allocation3 + $0x9c] sm:$0xf]
    %v117 = vld [vmem:[#allocation3 + $0xa0] sm:$0xf]
    %v118 = vld [vmem:[#allocation3 + $0xa4] sm:$0xf]
    %v119 = vld [vmem:[#allocation3 + $0xa8] sm:$0xf]
    %v120 = vld [vmem:[#allocation3 + $0xac] sm:$0xf]
    %v121 = vld [vmem:[#allocation3 + $0xb0] sm:$0xf]
    %v122 = vld [vmem:[#allocation3 + $0xb4] sm:$0xf]
    %v123 = vld [vmem:[#allocation3 + $0xb8] sm:$0xf]
    %v124 = vld [vmem:[#allocation3 + $0xbc] sm:$0xf]
    %v125 = vld [vmem:[#allocation3 + $0xc0] sm:$0xf]
    %v126 = vld [vmem:[#allocation3 + $0xc4] sm:$0xf]
    %v127 = vld [vmem:[#allocation3 + $0xc8] sm:$0xf]
    %v128 = vld [vmem:[#allocation3 + $0xcc] sm:$0xf]
    %v129 = vld [vmem:[#allocation3 + $0xd0] sm:$0xf]
    %v130 = vld [vmem:[#allocation3 + $0xd4] sm:$0xf]
    %v131 = vld [vmem:[#allocation3 + $0xd8] sm:$0xf]
    %v132 = vld [vmem:[#allocation3 + $0xdc] sm:$0xf]
    %v133 = vld [vmem:[#allocation3 + $0xe0] sm:$0xf]
    %v134 = vld [vmem:[#allocation3 + $0xe4] sm:$0xf]
    %v135 = vld [vmem:[#allocation3 + $0xe8] sm:$0xf]
    %v136 = vld [vmem:[#allocation3 + $0xec] sm:$0xf]
    %v137 = vld [vmem:[#allocation3 + $0xf0] sm:$0xf]
    %v138 = vld [vmem:[#allocation3 + $0xf4] sm:$0xf]
    %v139 = vld [vmem:[#allocation3 + $0xf8] sm:$0xf]
    %v140 = vld [vmem:[#allocation3 + $0xfc] sm:$0xf]
    %v141 = vld [vmem:[#allocation3 + $0x100] sm:$0xf]
    %v142 = vld [vmem:[#allocation3 + $0x104] sm:$0xf]
    %v143 = vld [vmem:[#allocation3 + $0x108] sm:$0xf]
    %v144 = vld [vmem:[#allocation3 + $0x10c] sm:$0xf]
    %v145 = vld [vmem:[#allocation3 + $0x110] sm:$0xf]
    %v146 = vld [vmem:[#allocation3 + $0x114] sm:$0xf]
    %v147 = vld [vmem:[#allocation3 + $0x118] sm:$0xf]
    %v148 = vld [vmem:[#allocation3 + $0x11c] sm:$0xf]
    %v149 = vld [vmem:[#allocation3 + $0x120] sm:$0xf]
    %v150 = vld [vmem:[#allocation3 + $0x124] sm:$0xf]
    %v151 = vld [vmem:[#allocation3 + $0x128] sm:$0xf]
    %v152 = vld [vmem:[#allocation3 + $0x12c] sm:$0xf]
    %v153 = vld [vmem:[#allocation3 + $0x130] sm:$0xf]
    %v154 = vld [vmem:[#allocation3 + $0x134] sm:$0xf]
    %v155 = vld [vmem:[#allocation3 + $0x138] sm:$0xf]
    %v156 = vld [vmem:[#allocation3 + $0x13c] sm:$0xf]
    %v157 = vld [vmem:[#allocation3 + $0x140] sm:$0xf]
    %v158 = vld [vmem:[#allocation3 + $0x144] sm:$0xf]
    %v159 = vld [vmem:[#allocation3 + $0x148] sm:$0xf]
    %v160 = vld [vmem:[#allocation3 + $0x14c] sm:$0xf]
    %v161 = vld [vmem:[#allocation3 + $0x150] sm:$0xf]
    %v162 = vld [vmem:[#allocation3 + $0x154] sm:$0xf]
    %v163 = vld [vmem:[#allocation3 + $0x158] sm:$0xf]
    %v164 = vld [vmem:[#allocation3 + $0x15c] sm:$0xf]
    %v165 = vld [vmem:[#allocation3 + $0x160] sm:$0xf]
    %v166 = vld [vmem:[#allocation3 + $0x164] sm:$0xf]
    %v167 = vld [vmem:[#allocation3 + $0x168] sm:$0xf]
    %v168 = vld [vmem:[#allocation3 + $0x16c] sm:$0xf]
    %v169 = vld [vmem:[#allocation3 + $0x170] sm:$0xf]
    %v170 = vld [vmem:[#allocation3 + $0x174] sm:$0xf]
    %v171 = vld [vmem:[#allocation3 + $0x178] sm:$0xf]
    %v172 = vld [vmem:[#allocation3 + $0x17c] sm:$0xf]
    %v173 = vld [vmem:[#allocation3 + $0x180] sm:$0xf]
    %v174 = vld [vmem:[#allocation3 + $0x184] sm:$0xf]
    %v175 = vld [vmem:[#allocation3 + $0x188] sm:$0xf]
    %v176 = vld [vmem:[#allocation3 + $0x18c] sm:$0xf]
    %v177 = vld [vmem:[#allocation3 + $0x190] sm:$0xf]
    %v178 = vld [vmem:[#allocation3 + $0x194] sm:$0xf]
    %v179 = vld [vmem:[#allocation3 + $0x198] sm:$0xf]
    %v180 = vld [vmem:[#allocation3 + $0x19c] sm:$0xf]
    %v181 = vld [vmem:[#allocation3 + $0x1a0] sm:$0xf]
    %v182 = vld [vmem:[#allocation3 + $0x1a4] sm:$0xf]
    %v183 = vld [vmem:[#allocation3 + $0x1a8] sm:$0xf]
    %v184 = vld [vmem:[#allocation3 + $0x1ac] sm:$0xf]
    %v185 = vld [vmem:[#allocation3 + $0x1b0] sm:$0xf]
    %v186 = vld [vmem:[#allocation3 + $0x1b4] sm:$0xf]
    %v187 = vld [vmem:[#allocation3 + $0x1b8] sm:$0xf]
    %v188 = vld [vmem:[#allocation3 + $0x1bc] sm:$0xf]
    %v189 = vld [vmem:[#allocation3 + $0x1c0] sm:$0xf]
    %v190 = vld [vmem:[#allocation3 + $0x1c4] sm:$0xf]
    %v191 = vld [vmem:[#allocation3 + $0x1c8] sm:$0xf]
    %v192 = vld [vmem:[#allocation3 + $0x1cc] sm:$0xf]
    %v193 = vld [vmem:[#allocation3 + $0x1d0] sm:$0xf]
    %v194 = vld [vmem:[#allocation3 + $0x1d4] sm:$0xf]
    %v195 = vld [vmem:[#allocation3 + $0x1d8] sm:$0xf]
    %v196 = vld [vmem:[#allocation3 + $0x1dc] sm:$0xf]
    %v197 = vld [vmem:[#allocation3 + $0x1e0] sm:$0xf]
    %v198 = vld [vmem:[#allocation3 + $0x1e4] sm:$0xf]
    %v199 = vld [vmem:[#allocation3 + $0x1e8] sm:$0xf]
    %v200 = vld [vmem:[#allocation3 + $0x1ec] sm:$0xf]
    %v201 = vld [vmem:[#allocation3 + $0x1f0] sm:$0xf]
    %v202 = vld [vmem:[#allocation3 + $0x1f4] sm:$0xf]
    %v203 = vld [vmem:[#allocation3 + $0x1f8] sm:$0xf]
    %v204 = vld [vmem:[#allocation3 + $0x1fc] sm:$0xf]
    %v205 = vld [vmem:[%s6] sm:$0x1]
    %v206 = vld [vmem:[%s7] sm:$0x1]
    %v207 = vld [vmem:[%s8] sm:$0xf]
    %v208 = vld [vmem:[%s8 + $0x4] sm:$0xf]
    %v209 = vld [vmem:[%s8 + $0x8] sm:$0xf]
    %v210 = vld [vmem:[%s8 + $0xc] sm:$0xf]
    %v211 = vld [vmem:[%s8 + $0x10] sm:$0xf]
    %v212 = vld [vmem:[%s8 + $0x14] sm:$0xf]
    %v213 = vld [vmem:[%s8 + $0x18] sm:$0xf]
    %v214 = vld [vmem:[%s8 + $0x1c] sm:$0xf]
    %v215 = vld [vmem:[%s8 + $0x20] sm:$0xf]
    %v216 = vld [vmem:[%s8 + $0x24] sm:$0xf]
    %v217 = vld [vmem:[%s8 + $0x28] sm:$0xf]
    %v218 = vld [vmem:[%s8 + $0x2c] sm:$0xf]
    %v219 = vld [vmem:[%s8 + $0x30] sm:$0xf]
    %v220 = vld [vmem:[%s8 + $0x34] sm:$0xf]
    %v221 = vld [vmem:[%s8 + $0x38] sm:$0xf]
    %v222 = vld [vmem:[%s8 + $0x3c] sm:$0xf]
    %v223 = vld [vmem:[%s9] sm:$0x1]
    %v224 = vld [vmem:[%s10] sm:$0xf]
    %v225 = vld [vmem:[%s10 + $0x4] sm:$0xf]
    %v226 = vld [vmem:[%s10 + $0x8] sm:$0xf]
    %v227 = vld [vmem:[%s10 + $0xc] sm:$0xf]
    %v228 = vld [vmem:[%s10 + $0x10] sm:$0xf]
    %v229 = vld [vmem:[%s10 + $0x14] sm:$0xf]
    %v230 = vld [vmem:[%s10 + $0x18] sm:$0xf]
    %v231 = vld [vmem:[%s10 + $0x1c] sm:$0xf]
    %v232 = vld [vmem:[%s10 + $0x20] sm:$0xf]
    %v233 = vld [vmem:[%s10 + $0x24] sm:$0xf]
    %v234 = vld [vmem:[%s10 + $0x28] sm:$0xf]
    %v235 = vld [vmem:[%s10 + $0x2c] sm:$0xf]
    %v236 = vld [vmem:[%s10 + $0x30] sm:$0xf]
    %v237 = vld [vmem:[%s10 + $0x34] sm:$0xf]
    %v238 = vld [vmem:[%s10 + $0x38] sm:$0xf]
    %v239 = vld [vmem:[%s10 + $0x3c] sm:$0xf]
    %v240 = vld [vmem:[%s11] sm:$0x1]
    %v241 = vpack.c.bf16 %v67, %v59
    %v242 = vpack.c.bf16 %v68, %v60
    %v243 = vpack.c.bf16 %v69, %v61
    %v244 = vpack.c.bf16 %v70, %v62
    %v245 = vpack.c.bf16 %v71, %v63
    %v246 = vpack.c.bf16 %v72, %v64
    %v247 = vpack.c.bf16 %v73, %v65
    %v248 = vpack.c.bf16 %v74, %v66
    %v250 = vperm.slane %v206, 0
    %v380 = vunpack.c.l.b16 %v77
    %v381 = vunpack.c.l.b16 %v78
    %v382 = vunpack.c.l.b16 %v79
    %v383 = vunpack.c.l.b16 %v80
    %v384 = vunpack.c.l.b16 %v81
    %v385 = vunpack.c.l.b16 %v82
    %v386 = vunpack.c.l.b16 %v83
    %v387 = vunpack.c.l.b16 %v84
    %v388 = vunpack.c.l.b16 %v85
    %v389 = vunpack.c.l.b16 %v86
    %v390 = vunpack.c.l.b16 %v87
    %v391 = vunpack.c.l.b16 %v88
    %v392 = vunpack.c.l.b16 %v89
    %v393 = vunpack.c.l.b16 %v90
    %v394 = vunpack.c.l.b16 %v91
    %v395 = vunpack.c.l.b16 %v92
    %v396 = vunpack.c.l.b16 %v93
    %v397 = vunpack.c.l.b16 %v94
    %v398 = vunpack.c.l.b16 %v95
    %v399 = vunpack.c.l.b16 %v96
    %v400 = vunpack.c.l.b16 %v97
    %v401 = vunpack.c.l.b16 %v98
    %v402 = vunpack.c.l.b16 %v99
    %v403 = vunpack.c.l.b16 %v100
    %v404 = vunpack.c.l.b16 %v101
    %v405 = vunpack.c.l.b16 %v102
    %v406 = vunpack.c.l.b16 %v103
    %v407 = vunpack.c.l.b16 %v104
    %v408 = vunpack.c.l.b16 %v105
    %v409 = vunpack.c.l.b16 %v106
    %v410 = vunpack.c.l.b16 %v107
    %v411 = vunpack.c.l.b16 %v108
    %v412 = vunpack.c.l.b16 %v109
    %v413 = vunpack.c.l.b16 %v110
    %v414 = vunpack.c.l.b16 %v111
    %v415 = vunpack.c.l.b16 %v112
    %v416 = vunpack.c.l.b16 %v113
    %v417 = vunpack.c.l.b16 %v114
    %v418 = vunpack.c.l.b16 %v115
    %v419 = vunpack.c.l.b16 %v116
    %v420 = vunpack.c.l.b16 %v117
    %v421 = vunpack.c.l.b16 %v118
    %v422 = vunpack.c.l.b16 %v119
    %v423 = vunpack.c.l.b16 %v120
    %v424 = vunpack.c.l.b16 %v121
    %v425 = vunpack.c.l.b16 %v122
    %v426 = vunpack.c.l.b16 %v123
    %v427 = vunpack.c.l.b16 %v124
    %v428 = vunpack.c.l.b16 %v125
    %v429 = vunpack.c.l.b16 %v126
    %v430 = vunpack.c.l.b16 %v127
    %v431 = vunpack.c.l.b16 %v128
    %v432 = vunpack.c.l.b16 %v129
    %v433 = vunpack.c.l.b16 %v130
    %v434 = vunpack.c.l.b16 %v131
    %v435 = vunpack.c.l.b16 %v132
    %v436 = vunpack.c.l.b16 %v133
    %v437 = vunpack.c.l.b16 %v134
    %v438 = vunpack.c.l.b16 %v135
    %v439 = vunpack.c.l.b16 %v136
    %v440 = vunpack.c.l.b16 %v137
    %v441 = vunpack.c.l.b16 %v138
    %v442 = vunpack.c.l.b16 %v139
    %v443 = vunpack.c.l.b16 %v140
    %v444 = vunpack.c.l.b16 %v141
    %v445 = vunpack.c.l.b16 %v142
    %v446 = vunpack.c.l.b16 %v143
    %v447 = vunpack.c.l.b16 %v144
    %v448 = vunpack.c.l.b16 %v145
    %v449 = vunpack.c.l.b16 %v146
    %v450 = vunpack.c.l.b16 %v147
    %v451 = vunpack.c.l.b16 %v148
    %v452 = vunpack.c.l.b16 %v149
    %v453 = vunpack.c.l.b16 %v150
    %v454 = vunpack.c.l.b16 %v151
    %v455 = vunpack.c.l.b16 %v152
    %v456 = vunpack.c.l.b16 %v153
    %v457 = vunpack.c.l.b16 %v154
    %v458 = vunpack.c.l.b16 %v155
    %v459 = vunpack.c.l.b16 %v156
    %v460 = vunpack.c.l.b16 %v157
    %v461 = vunpack.c.l.b16 %v158
    %v462 = vunpack.c.l.b16 %v159
    %v463 = vunpack.c.l.b16 %v160
    %v464 = vunpack.c.l.b16 %v161
    %v465 = vunpack.c.l.b16 %v162
    %v466 = vunpack.c.l.b16 %v163
    %v467 = vunpack.c.l.b16 %v164
    %v468 = vunpack.c.l.b16 %v165
    %v469 = vunpack.c.l.b16 %v166
    %v470 = vunpack.c.l.b16 %v167
    %v471 = vunpack.c.l.b16 %v168
    %v472 = vunpack.c.l.b16 %v169
    %v473 = vunpack.c.l.b16 %v170
    %v474 = vunpack.c.l.b16 %v171
    %v475 = vunpack.c.l.b16 %v172
    %v476 = vunpack.c.l.b16 %v173
    %v477 = vunpack.c.l.b16 %v174
    %v478 = vunpack.c.l.b16 %v175
    %v479 = vunpack.c.l.b16 %v176
    %v480 = vunpack.c.l.b16 %v177
    %v481 = vunpack.c.l.b16 %v178
    %v482 = vunpack.c.l.b16 %v179
    %v483 = vunpack.c.l.b16 %v180
    %v484 = vunpack.c.l.b16 %v181
    %v485 = vunpack.c.l.b16 %v182
    %v486 = vunpack.c.l.b16 %v183
    %v487 = vunpack.c.l.b16 %v184
    %v488 = vunpack.c.l.b16 %v185
    %v489 = vunpack.c.l.b16 %v186
    %v490 = vunpack.c.l.b16 %v187
    %v491 = vunpack.c.l.b16 %v188
    %v492 = vunpack.c.l.b16 %v189
    %v493 = vunpack.c.l.b16 %v190
    %v494 = vunpack.c.l.b16 %v191
    %v495 = vunpack.c.l.b16 %v192
    %v496 = vunpack.c.l.b16 %v193
    %v497 = vunpack.c.l.b16 %v194
    %v498 = vunpack.c.l.b16 %v195
    %v499 = vunpack.c.l.b16 %v196
    %v500 = vunpack.c.l.b16 %v197
    %v501 = vunpack.c.l.b16 %v198
    %v502 = vunpack.c.l.b16 %v199
    %v503 = vunpack.c.l.b16 %v200
    %v504 = vunpack.c.l.b16 %v201
    %v505 = vunpack.c.l.b16 %v202
    %v506 = vunpack.c.l.b16 %v203
    %v507 = vunpack.c.l.b16 %v204
    %v508 = vpack.c.b16 %v381, %v380
    %v509 = vpack.c.b16 %v383, %v382
    %v510 = vpack.c.b16 %v385, %v384
    %v511 = vpack.c.b16 %v387, %v386
    %v512 = vpack.c.b16 %v389, %v388
    %v513 = vpack.c.b16 %v391, %v390
    %v514 = vpack.c.b16 %v393, %v392
    %v515 = vpack.c.b16 %v395, %v394
    %v516 = vpack.c.b16 %v397, %v396
    %v517 = vpack.c.b16 %v399, %v398
    %v518 = vpack.c.b16 %v401, %v400
    %v519 = vpack.c.b16 %v403, %v402
    %v520 = vpack.c.b16 %v405, %v404
    %v521 = vpack.c.b16 %v407, %v406
    %v522 = vpack.c.b16 %v409, %v408
    %v523 = vpack.c.b16 %v411, %v410
    %v524 = vpack.c.b16 %v413, %v412
    %v525 = vpack.c.b16 %v415, %v414
    %v526 = vpack.c.b16 %v417, %v416
    %v527 = vpack.c.b16 %v419, %v418
    %v528 = vpack.c.b16 %v421, %v420
    %v529 = vpack.c.b16 %v423, %v422
    %v530 = vpack.c.b16 %v425, %v424
    %v531 = vpack.c.b16 %v427, %v426
    %v532 = vpack.c.b16 %v429, %v428
    %v533 = vpack.c.b16 %v431, %v430
    %v534 = vpack.c.b16 %v433, %v432
    %v535 = vpack.c.b16 %v435, %v434
    %v536 = vpack.c.b16 %v437, %v436
    %v537 = vpack.c.b16 %v439, %v438
    %v538 = vpack.c.b16 %v441, %v440
    %v539 = vpack.c.b16 %v443, %v442
    %v540 = vpack.c.b16 %v445, %v444
    %v541 = vpack.c.b16 %v447, %v446
    %v542 = vpack.c.b16 %v449, %v448
    %v543 = vpack.c.b16 %v451, %v450
    %v544 = vpack.c.b16 %v453, %v452
    %v545 = vpack.c.b16 %v455, %v454
    %v546 = vpack.c.b16 %v457, %v456
    %v547 = vpack.c.b16 %v459, %v458
    %v548 = vpack.c.b16 %v461, %v460
    %v549 = vpack.c.b16 %v463, %v462
    %v550 = vpack.c.b16 %v465, %v464
    %v551 = vpack.c.b16 %v467, %v466
    %v552 = vpack.c.b16 %v469, %v468
    %v553 = vpack.c.b16 %v471, %v470
    %v554 = vpack.c.b16 %v473, %v472
    %v555 = vpack.c.b16 %v475, %v474
    %v556 = vpack.c.b16 %v477, %v476
    %v557 = vpack.c.b16 %v479, %v478
    %v558 = vpack.c.b16 %v481, %v480
    %v559 = vpack.c.b16 %v483, %v482
    %v560 = vpack.c.b16 %v485, %v484
    %v561 = vpack.c.b16 %v487, %v486
    %v562 = vpack.c.b16 %v489, %v488
    %v563 = vpack.c.b16 %v491, %v490
    %v564 = vpack.c.b16 %v493, %v492
    %v565 = vpack.c.b16 %v495, %v494
    %v566 = vpack.c.b16 %v497, %v496
    %v567 = vpack.c.b16 %v499, %v498
    %v568 = vpack.c.b16 %v501, %v500
    %v569 = vpack.c.b16 %v503, %v502
    %v570 = vpack.c.b16 %v505, %v504
    %v571 = vpack.c.b16 %v507, %v506
    %636 = vmatpush.bf16.msra.mxu0 %v515
    %637 = vmatpush.bf16.msra.mxu0 %v514
    %638 = vmatpush.bf16.msra.mxu0 %v513
    %639 = vmatpush.bf16.msra.mxu0 %v512
    %640 = vmatpush.bf16.msra.mxu0 %v511
    %641 = vmatpush.bf16.msra.mxu0 %v510
    %642 = vmatpush.bf16.msra.mxu0 %v509
    %643 = vmatpush.bf16.msra.mxu0 %v508
    %644 = vmatmul.bf16.gmra.mxu0 %v241
    %v645 = vpop.f32.mrf.mxu0
    %v646 = vadd.f32 %v250, %v645
    %v647 = vpop.f32.mrf.mxu0
    %v648 = vadd.f32 %v250, %v647
    %649 = vdwg.mxu0
    %650 = vmatpush.bf16.msra.mxu0 %v523
    %651 = vmatpush.bf16.msra.mxu0 %v522
    %652 = vmatpush.bf16.msra.mxu0 %v521
    %653 = vmatpush.bf16.msra.mxu0 %v520
    %654 = vmatpush.bf16.msra.mxu0 %v519
    %655 = vmatpush.bf16.msra.mxu0 %v518
    %656 = vmatpush.bf16.msra.mxu0 %v517
    %657 = vmatpush.bf16.msra.mxu0 %v516
    %658 = vmatmul.bf16.gmra.mxu0 %v242
    %v659 = vpop.f32.mrf.mxu0
    %v660 = vadd.f32 %v646, %v659
    %v661 = vpop.f32.mrf.mxu0
    %v662 = vadd.f32 %v648, %v661
    %663 = vdwg.mxu0
    %664 = vmatpush.bf16.msra.mxu0 %v531
    %665 = vmatpush.bf16.msra.mxu0 %v530
    %666 = vmatpush.bf16.msra.mxu0 %v529
    %667 = vmatpush.bf16.msra.mxu0 %v528
    %668 = vmatpush.bf16.msra.mxu0 %v527
    %669 = vmatpush.bf16.msra.mxu0 %v526
    %670 = vmatpush.bf16.msra.mxu0 %v525
    %671 = vmatpush.bf16.msra.mxu0 %v524
    %672 = vmatmul.bf16.gmra.mxu0 %v243
    %v673 = vpop.f32.mrf.mxu0
    %v674 = vadd.f32 %v660, %v673
    %v675 = vpop.f32.mrf.mxu0
    %v676 = vadd.f32 %v662, %v675
    %677 = vdwg.mxu0
    %678 = vmatpush.bf16.msra.mxu0 %v539
    %679 = vmatpush.bf16.msra.mxu0 %v538
    %680 = vmatpush.bf16.msra.mxu0 %v537
    %681 = vmatpush.bf16.msra.mxu0 %v536
    %682 = vmatpush.bf16.msra.mxu0 %v535
    %683 = vmatpush.bf16.msra.mxu0 %v534
    %684 = vmatpush.bf16.msra.mxu0 %v533
    %685 = vmatpush.bf16.msra.mxu0 %v532
    %686 = vmatmul.bf16.gmra.mxu0 %v244
    %v687 = vpop.f32.mrf.mxu0
    %v688 = vadd.f32 %v674, %v687
    %v689 = vpop.f32.mrf.mxu0
    %v690 = vadd.f32 %v676, %v689
    %691 = vdwg.mxu0
    %692 = vmatpush.bf16.msra.mxu0 %v547
    %693 = vmatpush.bf16.msra.mxu0 %v546
    %694 = vmatpush.bf16.msra.mxu0 %v545
    %695 = vmatpush.bf16.msra.mxu0 %v544
    %696 = vmatpush.bf16.msra.mxu0 %v543
    %697 = vmatpush.bf16.msra.mxu0 %v542
    %698 = vmatpush.bf16.msra.mxu0 %v541
    %699 = vmatpush.bf16.msra.mxu0 %v540
    %700 = vmatmul.bf16.gmra.mxu0 %v245
    %v701 = vpop.f32.mrf.mxu0
    %v702 = vadd.f32 %v688, %v701
    %v703 = vpop.f32.mrf.mxu0
    %v704 = vadd.f32 %v690, %v703
    %705 = vdwg.mxu0
    %706 = vmatpush.bf16.msra.mxu0 %v555
    %707 = vmatpush.bf16.msra.mxu0 %v554
    %708 = vmatpush.bf16.msra.mxu0 %v553
    %709 = vmatpush.bf16.msra.mxu0 %v552
    %710 = vmatpush.bf16.msra.mxu0 %v551
    %711 = vmatpush.bf16.msra.mxu0 %v550
    %712 = vmatpush.bf16.msra.mxu0 %v549
    %713 = vmatpush.bf16.msra.mxu0 %v548
    %714 = vmatmul.bf16.gmra.mxu0 %v246
    %v715 = vpop.f32.mrf.mxu0
    %v716 = vadd.f32 %v702, %v715
    %v717 = vpop.f32.mrf.mxu0
    %v718 = vadd.f32 %v704, %v717
    %719 = vdwg.mxu0
    %720 = vmatpush.bf16.msra.mxu0 %v563
    %721 = vmatpush.bf16.msra.mxu0 %v562
    %722 = vmatpush.bf16.msra.mxu0 %v561
    %723 = vmatpush.bf16.msra.mxu0 %v560
    %724 = vmatpush.bf16.msra.mxu0 %v559
    %725 = vmatpush.bf16.msra.mxu0 %v558
    %726 = vmatpush.bf16.msra.mxu0 %v557
    %727 = vmatpush.bf16.msra.mxu0 %v556
    %728 = vmatmul.bf16.gmra.mxu0 %v247
    %v729 = vpop.f32.mrf.mxu0
    %v730 = vadd.f32 %v716, %v729
    %v731 = vpop.f32.mrf.mxu0
    %v732 = vadd.f32 %v718, %v731
    %733 = vdwg.mxu0
    %734 = vmatpush.bf16.msra.mxu0 %v571
    %735 = vmatpush.bf16.msra.mxu0 %v570
    %736 = vmatpush.bf16.msra.mxu0 %v569
    %737 = vmatpush.bf16.msra.mxu0 %v568
    %738 = vmatpush.bf16.msra.mxu0 %v567
    %739 = vmatpush.bf16.msra.mxu0 %v566
    %740 = vmatpush.bf16.msra.mxu0 %v565
    %741 = vmatpush.bf16.msra.mxu0 %v564
    %742 = vmatmul.bf16.gmra.mxu0 %v248
    %v743 = vpop.f32.mrf.mxu0
    %v744 = vadd.f32 %v730, %v743
    %v745 = vpop.f32.mrf.mxu0
    %v746 = vadd.f32 %v732, %v745
    %747 = vdwg.mxu0
    %v748 = vpack.c.bf16 %v75, %v75
    %v749 = vpack.c.bf16 %v76, %v76
    %v750 = vunpack.c.l.bf16 %v748
    %v751 = vunpack.c.l.bf16 %v749
    %v752 = vunpack.c.l.bf16 %v205
    %754 = vset.pattern.permute.xlu0 0
    %755 = vperm.xlu0 %754, %v750
    %v756 = vpop.permute.xlu0 %755
    %759 = vset.pattern.permute.xlu0 0
    %760 = vperm.xlu0 %759, %v751
    %v761 = vpop.permute.xlu0 %760
    %v763 = vperm.slane %v752, 0
    %v764 = vmul.f32 %v756, %v763
    %v765 = vmul.f32 %v761, %v763
    %v766 = vadd.f32 %v744, %v764
    %v767 = vadd.f32 %v746, %v765
    %768 = vset.pattern.permute.xlu0 1
    %769 = vperm.xlu0 %768, %v750
    %v770 = vpop.permute.xlu0 %769
    %772 = vset.pattern.permute.xlu0 1
    %773 = vperm.xlu0 %772, %v751
    %v774 = vpop.permute.xlu0 %773
    %v776 = vperm.slane %v752, 1
    %v777 = vmul.f32 %v770, %v776
    %v778 = vmul.f32 %v774, %v776
    %v779 = vadd.f32 %v766, %v777
    %v780 = vadd.f32 %v767, %v778
    %v781 = vtanh.pop %v779
    %v782 = vtanh.pop %v780
    %v783 = vpack.c.bf16 %v782, %v781
    %v785 = vperm.slane %v223, 0
    %v803 = vunpack.c.l.b16 %v207
    %v804 = vunpack.c.l.b16 %v208
    %v805 = vunpack.c.l.b16 %v209
    %v806 = vunpack.c.l.b16 %v210
    %v807 = vunpack.c.l.b16 %v211
    %v808 = vunpack.c.l.b16 %v212
    %v809 = vunpack.c.l.b16 %v213
    %v810 = vunpack.c.l.b16 %v214
    %v811 = vunpack.c.l.b16 %v215
    %v812 = vunpack.c.l.b16 %v216
    %v813 = vunpack.c.l.b16 %v217
    %v814 = vunpack.c.l.b16 %v218
    %v815 = vunpack.c.l.b16 %v219
    %v816 = vunpack.c.l.b16 %v220
    %v817 = vunpack.c.l.b16 %v221
    %v818 = vunpack.c.l.b16 %v222
    %v819 = vpack.c.b16 %v804, %v803
    %v820 = vpack.c.b16 %v806, %v805
    %v821 = vpack.c.b16 %v808, %v807
    %v822 = vpack.c.b16 %v810, %v809
    %v823 = vpack.c.b16 %v812, %v811
    %v824 = vpack.c.b16 %v814, %v813
    %v825 = vpack.c.b16 %v816, %v815
    %v826 = vpack.c.b16 %v818, %v817
    %835 = vmatpush.bf16.msra.mxu0 %v826
    %836 = vmatpush.bf16.msra.mxu0 %v825
    %837 = vmatpush.bf16.msra.mxu0 %v824
    %838 = vmatpush.bf16.msra.mxu0 %v823
    %839 = vmatpush.bf16.msra.mxu0 %v822
    %840 = vmatpush.bf16.msra.mxu0 %v821
    %841 = vmatpush.bf16.msra.mxu0 %v820
    %842 = vmatpush.bf16.msra.mxu0 %v819
    %843 = vmatmul.bf16.gmra.mxu0 %v783
    %v844 = vpop.f32.mrf.mxu0
    %v845 = vadd.f32 %v785, %v844
    %v846 = vpop.f32.mrf.mxu0
    %v847 = vadd.f32 %v785, %v846
    %848 = vdwg.mxu0
    %v849 = vtanh.pop %v845
    %v850 = vtanh.pop %v847
    %v851 = vpack.c.bf16 %v850, %v849
    %v853 = vperm.slane %v240, 0
    %v871 = vunpack.c.l.b16 %v224
    %v872 = vunpack.c.l.b16 %v225
    %v873 = vunpack.c.l.b16 %v226
    %v874 = vunpack.c.l.b16 %v227
    %v875 = vunpack.c.l.b16 %v228
    %v876 = vunpack.c.l.b16 %v229
    %v877 = vunpack.c.l.b16 %v230
    %v878 = vunpack.c.l.b16 %v231
    %v879 = vunpack.c.l.b16 %v232
    %v880 = vunpack.c.l.b16 %v233
    %v881 = vunpack.c.l.b16 %v234
    %v882 = vunpack.c.l.b16 %v235
    %v883 = vunpack.c.l.b16 %v236
    %v884 = vunpack.c.l.b16 %v237
    %v885 = vunpack.c.l.b16 %v238
    %v886 = vunpack.c.l.b16 %v239
    %v887 = vpack.c.b16 %v872, %v871
    %v888 = vpack.c.b16 %v874, %v873
    %v889 = vpack.c.b16 %v876, %v875
    %v890 = vpack.c.b16 %v878, %v877
    %v891 = vpack.c.b16 %v880, %v879
    %v892 = vpack.c.b16 %v882, %v881
    %v893 = vpack.c.b16 %v884, %v883
    %v894 = vpack.c.b16 %v886, %v885
    %903 = vmatpush.bf16.msra.mxu0 %v894
    %904 = vmatpush.bf16.msra.mxu0 %v893
    %905 = vmatpush.bf16.msra.mxu0 %v892
    %906 = vmatpush.bf16.msra.mxu0 %v891
    %907 = vmatpush.bf16.msra.mxu0 %v890
    %908 = vmatpush.bf16.msra.mxu0 %v889
    %909 = vmatpush.bf16.msra.mxu0 %v888
    %910 = vmatpush.bf16.msra.mxu0 %v887
    %911 = vmatmul.bf16.gmra.mxu0 %v851
    %v912 = vpop.f32.mrf.mxu0
    %v913 = vadd.f32 %v853, %v912
    %v914 = vpop.f32.mrf.mxu0
    %v915 = vadd.f32 %v853, %v914
    %916 = vdwg.mxu0
    %v917 = vlaneseq
    %v918 = vand.u32 %v917, 127
    %vm919 = vcmp.lt.s32.totalorder %v918, 3
    %v920 = vtanh.pop %v913
    %v921 = vtanh.pop %v915
    %v922 = vsel %vm919, %v920, %v913
    %v923 = vsel %vm919, %v921, %v915
    %v924 = vld [vmem:[%s2] sm:$0xff]
    %v925 = vld [vmem:[%s2 + $0x8] sm:$0xff]
    %v926 = vsub.f32 %v924, %v922
    %v927 = vsub.f32 %v925, %v923
    %v928 = vmul.f32 %v926, %v926
    %v929 = vmul.f32 %v927, %v927
    %v930 = vld [vmem:[%s3] sm:$0x1]
    %v932 = vperm.slane %v930, 0
    %v934 = vmul.f32 %v928, %v932
    %v935 = vmul.f32 %v929, %v932
    %936 = vadd.xlane.f32.xlu0 %v934
    %v937 = vpop.xlane.xlu0 %936
    %938 = vadd.xlane.f32.xlu0 %v935
    %v939 = vpop.xlane.xlu0 %938
    %v940 = vmul.f32 %v937, -0.5
    %v941 = vmul.f32 %v939, -0.5
    %v942 = vld [vmem:[#allocation2] sm:$0x1]
    %v944 = vperm.slane %v942, 0
    %v946 = vadd.f32 %v940, %v944
    %v947 = vadd.f32 %v941, %v944
    %vm948 = vcmp.eq.s32.totalorder %v918, 4
    %950 = vset.pattern.permute.xlu0 0
    %951 = vperm.xlu0 %950, %v946
    %v952 = vpop.permute.xlu0 %951
    %955 = vset.pattern.permute.xlu0 0
    %956 = vperm.xlu0 %955, %v947
    %v957 = vpop.permute.xlu0 %956
    %v959 = vsel %vm948, %v952, 0.0
    %v960 = vsel %vm948, %v957, 0.0
    %v961 = vadd.f32 %v922, %v959
    %v962 = vadd.f32 %v923, %v960
    %963 = vst [vmem:[%s12] sm:$0xff] %v961
    %964 = vst [vmem:[%s12 + $0x8] sm:$0xff] %v962
    // Predicated region
    $region54: #{_evaluate_fwd.1} parent=1 // pred_check
      _
    $region55: #{_evaluate_fwd.1} parent=1 // pred_check_branch
      %966 = sbr.rel (0) target = $region57
    $region56: #{_evaluate_fwd.1} parent=1 // pred_region
      _
    $region57: #{_evaluate_fwd.1} parent=1 // pred_fallthru
      _
    // Predicated region
    $region58: #{_evaluate_fwd.1} parent=1 // pred_check
      _
    $region59: #{_evaluate_fwd.1} parent=1 // pred_check_branch
      %968 = sbr.rel (0) target = $region61
    $region60: #{_evaluate_fwd.1} parent=1 // pred_region
      _
    $region61: #{_evaluate_fwd.1} parent=1 // pred_fallthru
      _
    %969 = vsyncpa [#allocation4], 1

</llo_original>
